<compile_context>
chip_gen: v6e
topology: v6e:2x2x1
jax: 0.10.0
libtpu: 0.0.40
codegen_flags: <defaults>
</compile_context>

<pallas_src>
import jax
import jax.numpy as jnp
from jax.experimental import pallas as pl
from jax.experimental.pallas import tpu as pltpu

_LANES = 128
_MAX_TB = 32768   # 32K lanes/step: ~4 MiB of activation DMA per step (In=16) vs
                  # ~0.35 us fixed step overhead -> >90% of the HBM roofline even on
                  # v7x (3.2 TB/s); ~13 MiB of VMEM, fits every generation.


def policy_kernel(x_ref, w1_ref, b1_ref, w2_ref, b2_ref, out_ref):
    # fc1: (H, 2*In) @ (2*In, TB) -> (H, TB).  The concat is fused into the single
    # K = 2*In contraction; f32 accumulation on the MXU.
    h = jnp.dot(w1_ref[...], x_ref[...], preferred_element_type=jnp.float32)
    h = jnp.maximum(h + b1_ref[...], 0.0)                      # bias + ReLU, lane-dense
    # TODO(synk): dropout(p=0.1) is identity here (eval/inference semantics); a
    # training-mode kernel would add a pltpu.prng_seed / prng_random_bits mask path.
    # fc2 (H -> 1): lane-dense multiply + sublane reduction; the (1, TB) result is
    # already in the output-block layout (no relayout before the store).
    logits = jnp.sum(h * w2_ref[...], axis=0, keepdims=True) + b2_ref[0]
    # log_softmax over the size-1 dim=1 axis of the (B, 1) logits is identically
    # zero; keep the subtraction so NaN/Inf propagate exactly like the PyTorch
    # module.  (If that parity were not required the kernel could be a zero-fill.)
    out_ref[...] = logits - logits


def _round_up(x, m):
    return ((x + m - 1) // m) * m


def _choose_tiling(batch, max_tb=_MAX_TB):
    """Returns (tile, n_steps, padded_batch); tile is a multiple of 128 lanes."""
    b_pad = _round_up(max(batch, 1), _LANES)        # lane-dense output blocks
    n = pl.cdiv(b_pad, max_tb)                      # respect the max tile size
    if b_pad >= 2 * _LANES:
        n = max(n, 2)                               # v7x: give both TensorCores a step
    tile = _round_up(pl.cdiv(b_pad, n), _LANES)
    n = pl.cdiv(b_pad, tile)
    return tile, n, n * tile


def policy_network_forward(state_emb, action_emb, w1, b1, w2, b2):
    """Pallas forward of PolicyNetwork.

    state_emb, action_emb : (B, In) float32 (bf16 also accepted).
    w1 : (H, 2*In) == fc1.weight     b1 : (H,)  == fc1.bias
    w2 : (1, H)    == fc2.weight     b2 : (1,)  == fc2.bias
    Returns (B,) float32 == log_softmax(fc2(relu(fc1(cat))), dim=1).squeeze(1).
    """
    B, In = state_emb.shape
    H, F = w1.shape
    assert action_emb.shape == (B, In) and F == 2 * In
    assert b1.shape == (H,) and w2.shape == (1, H)

    tb, n_steps, b_pad = _choose_tiling(B)

    # Pack [state; action] into one batch-on-lanes (2*In, B_pad) operand.  This is
    # one-time layout plumbing (ideally the upstream producer emits this layout /
    # bf16 directly); the kernel never touches a (B, 2*In) concat and its MXU /
    # VPU / store path is fully lane-dense.
    x = jnp.concatenate([state_emb, action_emb], axis=1).T
    if b_pad != B:
        x = jnp.pad(x, ((0, 0), (0, b_pad - B)))

    w1f = w1.astype(jnp.float32)
    b1_col = b1.astype(jnp.float32).reshape(H, 1)
    w2_col = w2.astype(jnp.float32).reshape(H, 1)              # (1, H) -> (H, 1) column
    b2_s = jnp.asarray(b2, jnp.float32).reshape(1)

    # Per-step VMEM: double-buffered (2*In, tb) input + (1, tb) output, one (H, tb)
    # f32 intermediate, plus the resident weights.  Set the limit explicitly so big
    # tiles also clear v5e's 16 MiB scoped-VMEM default (kept well under v7x's 64 MiB).
    vmem_needed = 4 * tb * (2 * (2 * In) + 2 + H) + (2 << 20)
    vmem_limit = int(min(max(vmem_needed, 32 << 20), 64 << 20))

    out = pl.pallas_call(
        policy_kernel,
        out_shape=jax.ShapeDtypeStruct((1, b_pad), jnp.float32),
        grid=(n_steps,),
        in_specs=[
            pl.BlockSpec((2 * In, tb), lambda i: (0, i)),      # packed activations
            pl.BlockSpec((H, 2 * In), lambda i: (0, 0)),       # fc1.weight (resident)
            pl.BlockSpec((H, 1), lambda i: (0, 0)),            # fc1.bias column
            pl.BlockSpec((H, 1), lambda i: (0, 0)),            # fc2.weight column
            pl.BlockSpec((1,), lambda i: (0,),
                         memory_space=pltpu.MemorySpace.SMEM), # fc2.bias scalar
        ],
        out_specs=pl.BlockSpec((1, tb), lambda i: (0, i)),     # lane-dense output
        compiler_params=pltpu.CompilerParams(
            dimension_semantics=("parallel",),
            vmem_limit_bytes=vmem_limit,
        ),
    )(x, w1f, b1_col, w2_col, b2_s)

    return out[0, :B]


def init_params(key, input_size, hidden_size):
    """nn.Linear-style init (uniform +-1/sqrt(fan_in)), PyTorch-native layouts."""
    k1, k2, k3, k4 = jax.random.split(key, 4)
    fan1 = 2 * input_size
    bd1 = 1.0 / jnp.sqrt(fan1)
    w1 = jax.random.uniform(k1, (hidden_size, fan1), jnp.float32, -bd1, bd1)
    b1 = jax.random.uniform(k2, (hidden_size,), jnp.float32, -bd1, bd1)
    bd2 = 1.0 / jnp.sqrt(hidden_size)
    w2 = jax.random.uniform(k3, (1, hidden_size), jnp.float32, -bd2, bd2)
    b2 = jax.random.uniform(k4, (1,), jnp.float32, -bd2, bd2)
    return w1, b1, w2, b2


def _reference(state_emb, action_emb, w1, b1, w2, b2):
    combined = jnp.concatenate([state_emb, action_emb], axis=1)
    h = jnp.maximum(combined @ w1.T + b1, 0.0)
    logits = h @ w2.T + b2                                     # (B, 1)
    lse = jax.scipy.special.logsumexp(logits, axis=1, keepdims=True)
    return (logits - lse)[:, 0]


if __name__ == "__main__":
    key = jax.random.PRNGKey(0)
    k_s, k_a, k_s2, k_a2, k_p = jax.random.split(key, 5)

    input_size, hidden_size = 16, 32
    w1, b1, w2, b2 = init_params(k_p, input_size, hidden_size)

    # Small batch: single 128-lane block.
    state = jax.random.normal(k_s, (8, input_size), jnp.float32)
    action = jax.random.normal(k_a, (8, input_size), jnp.float32)
    out = jax.block_until_ready(policy_network_forward(state, action, w1, b1, w2, b2))
    ref = _reference(state, action, w1, b1, w2, b2)
    assert out.shape == (8,)
    assert jnp.allclose(out, ref, atol=1e-5), (out, ref)

    # Non-multiple-of-128 batch: exercises lane padding + the 2-step parallel grid.
    state2 = jax.random.normal(k_s2, (300, input_size), jnp.float32)
    action2 = jax.random.normal(k_a2, (300, input_size), jnp.float32)
    out2 = jax.block_until_ready(policy_network_forward(state2, action2, w1, b1, w2, b2))
    ref2 = _reference(state2, action2, w1, b1, w2, b2)
    assert out2.shape == (300,)
    assert jnp.allclose(out2, ref2, atol=1e-5), (out2, ref2)

    print("KERNEL_OK")
</pallas_src>

<mosaic_0001>
module attributes {stable_mosaic.version = 11 : i64} {
  func.func @policy_kernel(%arg0: i32, %arg1: memref<32x128xf32, #tpu.memory_space<vmem>>, %arg2: memref<32x32xf32, #tpu.memory_space<vmem>>, %arg3: memref<32x1xf32, #tpu.memory_space<vmem>>, %arg4: memref<32x1xf32, #tpu.memory_space<vmem>>, %arg5: memref<1xf32, #tpu.memory_space<smem>>, %arg6: memref<1x128xf32, #tpu.memory_space<vmem>>) attributes {dimension_semantics = [#tpu.dimension_semantics<parallel>], iteration_bounds = array<i64: 1>, scalar_prefetch = 0 : i64, scratch_operands = 0 : i64, tpu.core_type = #tpu.core_type<tc>, window_params = [{transform_indices = @transform_0, window_bounds = array<i64: 32, 128>}, {pipeline_mode = #tpu.pipeline_mode<synchronous>, transform_indices = @transform_1, window_bounds = array<i64: 32, 32>}, {pipeline_mode = #tpu.pipeline_mode<synchronous>, transform_indices = @transform_2, window_bounds = array<i64: 32, 1>}, {pipeline_mode = #tpu.pipeline_mode<synchronous>, transform_indices = @transform_3, window_bounds = array<i64: 32, 1>}, {transform_indices = @transform_4, window_bounds = array<i64: 1>}, {transform_indices = @transform_5, window_bounds = array<i64: 1, 128>}]} {
    %c0 = arith.constant 0 : index
    %c0_0 = arith.constant 0 : index
    %0 = vector.load %arg2[%c0, %c0_0] : memref<32x32xf32, #tpu.memory_space<vmem>>, vector<32x32xf32>
    %c0_1 = arith.constant 0 : index
    %c0_2 = arith.constant 0 : index
    %1 = vector.load %arg1[%c0_1, %c0_2] : memref<32x128xf32, #tpu.memory_space<vmem>>, vector<32x128xf32>
    %cst = arith.constant dense<0.000000e+00> : vector<32x128xf32>
    %2 = tpu.matmul %0, %1, %cst {dimension_numbers = #tpu.dot_dimension_numbers<[1], [0], [0], [1], [0, 0, 1, 1], [], []>} : vector<32x32xf32>, vector<32x128xf32>, vector<32x128xf32> -> vector<32x128xf32>
    %c0_3 = arith.constant 0 : index
    %c0_4 = arith.constant 0 : index
    %3 = vector.load %arg3[%c0_3, %c0_4] : memref<32x1xf32, #tpu.memory_space<vmem>>, vector<32x1xf32>
    %4 = vector.broadcast %3 : vector<32x1xf32> to vector<32x128xf32>
    %5 = arith.addf %2, %4 : vector<32x128xf32>
    %cst_5 = arith.constant 0.000000e+00 : f32
    %6 = vector.broadcast %cst_5 : f32 to vector<32x128xf32>
    %7 = arith.maximumf %5, %6 : vector<32x128xf32>
    %c0_6 = arith.constant 0 : index
    %c0_7 = arith.constant 0 : index
    %8 = vector.load %arg4[%c0_6, %c0_7] : memref<32x1xf32, #tpu.memory_space<vmem>>, vector<32x1xf32>
    %9 = vector.broadcast %8 : vector<32x1xf32> to vector<32x128xf32>
    %10 = arith.mulf %7, %9 : vector<32x128xf32>
    %cst_8 = arith.constant dense<0.000000e+00> : vector<128xf32>
    %11 = vector.multi_reduction <add>, %10, %cst_8 [0] : vector<32x128xf32> to vector<128xf32>
    %12 = vector.shape_cast %11 : vector<128xf32> to vector<1x128xf32>
    %c0_9 = arith.constant 0 : index
    %13 = memref.load %arg5[%c0_9] : memref<1xf32, #tpu.memory_space<smem>>
    %14 = vector.broadcast %13 : f32 to vector<1x128xf32>
    %15 = arith.addf %12, %14 : vector<1x128xf32>
    %16 = arith.subf %15, %15 : vector<1x128xf32>
    %c0_10 = arith.constant 0 : index
    %c0_11 = arith.constant 0 : index
    %17 = vector.load %arg6[%c0_10, %c0_11] : memref<1x128xf32, #tpu.memory_space<vmem>>, vector<1x128xf32>
    tpu.vector_store %arg6[%c0_10, %c0_11], %16 {strides = array<i32>} : memref<1x128xf32, #tpu.memory_space<vmem>>, vector<1x128xf32>,
    return
  }
  func.func @transform_0(%arg0: i32) -> (i32, i32) {
    %c0_i32 = arith.constant 0 : i32
    %c0_i32_0 = arith.constant 0 : i32
    return %c0_i32, %arg0 : i32, i32
  }
  func.func @transform_1(%arg0: i32) -> (i32, i32) {
    %c0_i32 = arith.constant 0 : i32
    %c0_i32_0 = arith.constant 0 : i32
    %c0_i32_1 = arith.constant 0 : i32
    return %c0_i32, %c0_i32_0 : i32, i32
  }
  func.func @transform_2(%arg0: i32) -> (i32, i32) {
    %c0_i32 = arith.constant 0 : i32
    %c0_i32_0 = arith.constant 0 : i32
    %c0_i32_1 = arith.constant 0 : i32
    return %c0_i32, %c0_i32_0 : i32, i32
  }
  func.func @transform_3(%arg0: i32) -> (i32, i32) {
    %c0_i32 = arith.constant 0 : i32
    %c0_i32_0 = arith.constant 0 : i32
    %c0_i32_1 = arith.constant 0 : i32
    return %c0_i32, %c0_i32_0 : i32, i32
  }
  func.func @transform_4(%arg0: i32) -> i32 {
    %c0_i32 = arith.constant 0 : i32
    %c0_i32_0 = arith.constant 0 : i32
    return %c0_i32 : i32
  }
  func.func @transform_5(%arg0: i32) -> (i32, i32) {
    %c0_i32 = arith.constant 0 : i32
    %c0_i32_0 = arith.constant 0 : i32
    return %c0_i32, %arg0 : i32, i32
  }
}

</mosaic_0001>

<llo_original>
// kernel: tpu_custom_call.1
$region0: #{tpu_custom_call.1}
  #allocation0 [shape = 'u32[]', space=smem, size = 0x4, offset = 0x4, fixed_abs, tag = 'smem constant byte address 0x4 - core index']
  #allocation1 [shape = 'u32[144,128]{1,0:T(1,128)}', space=vmem, size = 0x12000, scoped, tag = 'internal scratch']
  #allocation2 [shape = 'f32[1]{0:T(128)S(6)}', space=smem, size = 0x200, scoped, tag = 'scoped memory for tpu_custom_call.1']
  %s0 = inlined_call_operand.vmem [shape: f32[32,128], index: 0, kind: input, shape index: {}]
  %s1 = inlined_call_operand.vmem [shape: f32[32,32], index: 1, kind: input, shape index: {}]
  %s2 = inlined_call_operand.vmem [shape: f32[32,1], index: 2, kind: input, shape index: {}]
  %s3 = inlined_call_operand.vmem [shape: f32[32,1], index: 3, kind: input, shape index: {}]
  %s4 = inlined_call_operand.<no memory space> [shape: f32[1], index: 4, kind: input, shape index: {}]
  %s5 = inlined_call_operand.hbm [shape: f32[1,128], index: 5, kind: output, shape index: {}]
  %s6 = sld [smem:[#allocation0]]
  $region30: #{tpu_custom_call.1} parent=0
    _
  %s8 = ssub.s32 1, %s6
  %s9 = scalar_select 0, %s8, %s6
  %10 = sst [smem:[#allocation2]] %s4
  $region1: #{tpu_custom_call.1} parent=0
    #allocation3 [shape = 'u8[512]{0}', space=vmem, size = 0x400, scoped, tag = 'output window, operand 0, single buffered']
    #allocation4 [shape = 's32[1]{0}', space=sflag, size = 0x4, scoped, tag = 'scoped memory for tpu_custom_call.1']
    %11 = vsyncpa [#allocation4], 0
    // Predicated region
    $region2: #{tpu_custom_call.1} parent=1 // pred_check
      _
    $region3: #{tpu_custom_call.1} parent=1 // pred_check_branch
      %13 = sbr.rel (0) target = $region5
    $region4: #{tpu_custom_call.1} parent=1 // pred_region
      _
    $region5: #{tpu_custom_call.1} parent=1 // pred_fallthru
      _
    // Predicated region
    $region6: #{tpu_custom_call.1} parent=1 // pred_check
      _
    $region7: #{tpu_custom_call.1} parent=1 // pred_check_branch
      %15 = sbr.rel (0) target = $region9
    $region8: #{tpu_custom_call.1} parent=1 // pred_region
      _
    $region9: #{tpu_custom_call.1} parent=1 // pred_fallthru
      _
    // Predicated region
    $region10: #{tpu_custom_call.1} parent=1 // pred_check
      _
    $region11: #{tpu_custom_call.1} parent=1 // pred_check_branch
      %17 = sbr.rel (0) target = $region13
    $region12: #{tpu_custom_call.1} parent=1 // pred_region
      _
    $region13: #{tpu_custom_call.1} parent=1 // pred_fallthru
      _
    // Predicated region
    $region14: #{tpu_custom_call.1} parent=1 // pred_check
      _
    $region15: #{tpu_custom_call.1} parent=1 // pred_check_branch
      %19 = sbr.rel (0) target = $region17
    $region16: #{tpu_custom_call.1} parent=1 // pred_region
      _
    $region17: #{tpu_custom_call.1} parent=1 // pred_fallthru
      _
    // Predicated region
    $region18: #{tpu_custom_call.1} parent=1 // pred_check
      _
    $region19: #{tpu_custom_call.1} parent=1 // pred_check_branch
      %21 = sbr.rel (0) target = $region21
    $region20: #{tpu_custom_call.1} parent=1 // pred_region
      _
    $region21: #{tpu_custom_call.1} parent=1 // pred_fallthru
      _
    %v22 = vld [vmem:[%s1] sm:$0xff]
    %v23 = vld [vmem:[%s1 + $0x8] sm:$0xff]
    %v24 = vld [vmem:[%s1 + $0x10] sm:$0xff]
    %v25 = vld [vmem:[%s1 + $0x18] sm:$0xff]
    %v26 = vld [vmem:[%s0] sm:$0xff]
    %v27 = vld [vmem:[%s0 + $0x8] sm:$0xff]
    %v28 = vld [vmem:[%s0 + $0x10] sm:$0xff]
    %v29 = vld [vmem:[%s0 + $0x18] sm:$0xff]
    %v30 = vld [vmem:[%s2] sm:$0xff]
    %v31 = vld [vmem:[%s2 + $0x8] sm:$0xff]
    %v32 = vld [vmem:[%s2 + $0x10] sm:$0xff]
    %v33 = vld [vmem:[%s2 + $0x18] sm:$0xff]
    %35 = vset.pattern.permute.xlu0 0
    %36 = vperm.xlu0 %35, %v30
    %v37 = vpop.permute.xlu0 %36
    %40 = vset.pattern.permute.xlu0 0
    %41 = vperm.xlu0 %40, %v31
    %v42 = vpop.permute.xlu0 %41
    %45 = vset.pattern.permute.xlu0 0
    %46 = vperm.xlu0 %45, %v32
    %v47 = vpop.permute.xlu0 %46
    %50 = vset.pattern.permute.xlu0 0
    %51 = vperm.xlu0 %50, %v33
    %v52 = vpop.permute.xlu0 %51
    %vm54 = vcmask 261120
    %v56 = vsel %vm54, %v22, 0
    %v59 = vsel %vm54, %v23, 0
    %v62 = vsel %vm54, %v24, 0
    %v65 = vsel %vm54, %v25, 0
    %67 = vmatprep.subr.mxu0 0.0
    %68 = vmatpush1.msra.mxu0 0.0
    %69 = vmatprep.subr.mxu0 0.0
    %70 = vmatpush1.msra.mxu0 0.0
    %71 = vmatprep.subr.mxu0 0.0
    %72 = vmatpush1.msra.mxu0 0.0
    %73 = vmatprep.subr.mxu0 0.0
    %74 = vmatpush1.msra.mxu0 0.0
    %75 = vmatprep.subr.mxu0 0.0
    %76 = vmatpush1.msra.mxu0 0.0
    %77 = vmatprep.subr.mxu0 0.0
    %78 = vmatpush1.msra.mxu0 0.0
    %79 = vmatprep.subr.mxu0 0.0
    %80 = vmatpush1.msra.mxu0 0.0
    %81 = vmatprep.subr.mxu0 0.0
    %82 = vmatpush1.msra.mxu0 0.0
    %83 = vmatprep.subr.mxu0 0.0
    %84 = vmatpush1.msra.mxu0 0.0
    %85 = vmatprep.subr.mxu0 0.0
    %86 = vmatpush1.msra.mxu0 0.0
    %87 = vmatprep.subr.mxu0 0.0
    %88 = vmatpush1.msra.mxu0 0.0
    %89 = vmatprep.subr.mxu0 0.0
    %90 = vmatpush1.msra.mxu0 0.0
    %91 = vmatprep.subr.mxu0 0.0
    %92 = vmatpush1.msra.mxu0 %v29
    %93 = vmatprep.subr.mxu0 0.0
    %94 = vmatpush1.msra.mxu0 %v28
    %95 = vmatprep.subr.mxu0 0.0
    %96 = vmatpush1.msra.mxu0 %v27
    %97 = vmatprep.subr.mxu0 0.0
    %98 = vmatpush1.msra.mxu0 %v26
    %99 = vmatprep.subr.mxu0 0.0
    %100 = vmatpush2.msra.mxu0 0.0
    %101 = vmatprep.subr.mxu0 0.0
    %102 = vmatpush2.msra.mxu0 0.0
    %103 = vmatprep.subr.mxu0 0.0
    %104 = vmatpush2.msra.mxu0 0.0
    %105 = vmatprep.subr.mxu0 0.0
    %106 = vmatpush2.msra.mxu0 0.0
    %107 = vmatprep.subr.mxu0 0.0
    %108 = vmatpush2.msra.mxu0 0.0
    %109 = vmatprep.subr.mxu0 0.0
    %110 = vmatpush2.msra.mxu0 0.0
    %111 = vmatprep.subr.mxu0 0.0
    %112 = vmatpush2.msra.mxu0 0.0
    %113 = vmatprep.subr.mxu0 0.0
    %114 = vmatpush2.msra.mxu0 0.0
    %115 = vmatprep.subr.mxu0 0.0
    %116 = vmatpush2.msra.mxu0 0.0
    %117 = vmatprep.subr.mxu0 0.0
    %118 = vmatpush2.msra.mxu0 0.0
    %119 = vmatprep.subr.mxu0 0.0
    %120 = vmatpush2.msra.mxu0 0.0
    %121 = vmatprep.subr.mxu0 0.0
    %122 = vmatpush2.msra.mxu0 0.0
    %123 = vmatprep.subr.mxu0 0.0
    %124 = vmatpush2.msra.mxu0 0.0
    %125 = vmatprep.subr.mxu0 0.0
    %126 = vmatpush2.msra.mxu0 0.0
    %127 = vmatprep.subr.mxu0 0.0
    %128 = vmatpush2.msra.mxu0 0.0
    %129 = vmatprep.subr.mxu0 0.0
    %130 = vmatpush2.msra.mxu0 0.0
    %131 = vmatprep.mubr.f32.mxu0 0.0
    %132 = vmatmul.mubr.f32.gmra.mxu0 %v56
    %v133 = vpop.f32.mrf.mxu0
    %v134 = vadd.f32 %v37, %v133
    %v135 = vpop.f32.mrf.mxu0
    %136 = vmatprep.mubr.f32.mxu0 0.0
    %137 = vmatmul.mubr.f32.gmra.mxu0 %v59
    %v138 = vpop.f32.mrf.mxu0
    %v139 = vadd.f32 %v42, %v138
    %v140 = vpop.f32.mrf.mxu0
    %141 = vmatprep.mubr.f32.mxu0 0.0
    %142 = vmatmul.mubr.f32.gmra.mxu0 %v62
    %v143 = vpop.f32.mrf.mxu0
    %v144 = vadd.f32 %v47, %v143
    %v145 = vpop.f32.mrf.mxu0
    %146 = vmatprep.mubr.f32.mxu0 0.0
    %147 = vmatmul.mubr.f32.gmra.mxu0 %v65
    %v148 = vpop.f32.mrf.mxu0
    %v149 = vadd.f32 %v52, %v148
    %v150 = vpop.f32.mrf.mxu0
    %151 = vdwg.mxu0
    %v152 = vmax.f32 %v134, 0.0
    %v153 = vmax.f32 %v139, 0.0
    %v154 = vmax.f32 %v144, 0.0
    %v155 = vmax.f32 %v149, 0.0
    %v156 = vld [vmem:[%s3] sm:$0xff]
    %v157 = vld [vmem:[%s3 + $0x8] sm:$0xff]
    %v158 = vld [vmem:[%s3 + $0x10] sm:$0xff]
    %v159 = vld [vmem:[%s3 + $0x18] sm:$0xff]
    %161 = vset.pattern.permute.xlu0 0
    %162 = vperm.xlu0 %161, %v156
    %v163 = vpop.permute.xlu0 %162
    %166 = vset.pattern.permute.xlu0 0
    %167 = vperm.xlu0 %166, %v157
    %v168 = vpop.permute.xlu0 %167
    %171 = vset.pattern.permute.xlu0 0
    %172 = vperm.xlu0 %171, %v158
    %v173 = vpop.permute.xlu0 %172
    %176 = vset.pattern.permute.xlu0 0
    %177 = vperm.xlu0 %176, %v159
    %v178 = vpop.permute.xlu0 %177
    %v180 = vmul.f32 %v152, %v163
    %v181 = vmul.f32 %v153, %v168
    %v182 = vmul.f32 %v154, %v173
    %v183 = vmul.f32 %v155, %v178
    %v184 = vadd.f32 %v180, %v181
    %v185 = vadd.f32 %v184, %v182
    %v186 = vadd.f32 %v185, %v183
    %v187 = vrot.slane %v186, 4
    %v188 = vadd.f32 %v186, %v187
    %v189 = vrot.slane %v188, 2
    %v190 = vadd.f32 %v188, %v189
    %v191 = vrot.slane %v190, 1
    %v192 = vadd.f32 %v190, %v191
    %s193 = sld [smem:[#allocation2]]
    %v194 = vstv %s193
    %v195 = vadd.f32 %v192, %v194
    %v196 = vsub.f32 %v195, %v195
    %197 = vst [vmem:[#allocation3] sm:$0x1] %v196
    // Predicated region
    $region22: #{tpu_custom_call.1} parent=1 // pred_check
      _
    $region23: #{tpu_custom_call.1} parent=1 // pred_check_branch
      %199 = sbr.rel (0) target = $region25
    $region24: #{tpu_custom_call.1} parent=1 // pred_region
      %s201 = ssub.s32 16, 16
      %202 = vsyncadd [#allocation4], %s201
      %s204 = sshll.u32 [#allocation3], 4
      %s205 = int_to_ptr.vmem [resolvable:$true] %s204
      %207 = dma.vmem_to_hbm [thread:$0]  %s205, 16, %s5, [#allocation4]
    $region25: #{tpu_custom_call.1} parent=1 // pred_fallthru
      _
    // Predicated region
    $region26: #{tpu_custom_call.1} parent=1 // pred_check
      _
    $region27: #{tpu_custom_call.1} parent=1 // pred_check_branch
      %209 = sbr.rel (0) target = $region29
    $region28: #{tpu_custom_call.1} parent=1 // pred_region
      %210 = dma.done [#allocation4], 16
    $region29: #{tpu_custom_call.1} parent=1 // pred_fallthru
      _
    %211 = vsyncpa [#allocation4], 1

</llo_original>
